<compile_context>
chip_gen: v6e
topology: v6e:2x2x1
jax: 0.10.0
libtpu: 0.0.40
codegen_flags: <defaults>
</compile_context>

<pallas_src>
import jax
import jax.numpy as jnp
import numpy as np
from jax.experimental import pallas as pl
from jax.experimental.pallas import tpu as pltpu


def _round_up(x, m):
    return ((x + m - 1) // m) * m


def _pick_tile(dim, align, max_tile):
    """Largest tile (multiple of `align`, <= max_tile) dividing the padded dim."""
    max_tile = max(align, (max_tile // align) * align)
    padded = _round_up(dim, align)
    if padded <= max_tile:
        return padded, padded
    for tile in range(max_tile, align - 1, -align):
        if padded % tile == 0:
            return tile, padded
    return max_tile, _round_up(padded, max_tile)  # unreachable: align divides


def taaf_dense_kernel(x_ref, w_ref, p_ref, o_ref, acc_ref):
    """One (tm, tn) output tile; K reduction over grid axis 2 (f32 accumulator)."""
    k = pl.program_id(2)

    # MXU matmul (bf16 or f32 inputs), f32 accumulation.
    prod = jnp.dot(x_ref[...], w_ref[...], preferred_element_type=jnp.float32)

    @pl.when(k == 0)
    def _init():
        acc_ref[...] = prod            # direct store: no zero-fill pass

    @pl.when(k > 0)
    def _accumulate():
        acc_ref[...] += prod

    @pl.when(k == pl.num_programs(2) - 1)
    def _epilogue():
        # Packed per-feature params: rows = alpha1, beta1, alpha2, beta2.
        p = p_ref[...]                            # (4, tn)
        a1, b1 = p[0:1, :], p[1:2, :]
        a2, b2 = p[2:3, :], p[3:4, :]
        h = a1 * acc_ref[...] + b1                # bottom ATU (broadcast over rows)
        h = jnp.tanh(h)                           # adaptive activation (EUP)
        o_ref[...] = (a2 * h + b2).astype(o_ref.dtype)  # top ATU


def make_taaf_dense(w, alpha1, beta1, alpha2, beta2, *,
                    tm_max=512, tn_max=512, tk_max=512,
                    mxu_dtype=jnp.bfloat16):
    """Prepare (pad + cast) weights and params ONCE; return apply(x).

    w: (in_size, n_hidden);  alpha*/beta*: (n_hidden,).
    mxu_dtype: MXU input dtype (default bf16; native on v5e/v6e/v7x).  Set to
    None for full-f32 MXU inputs.  Accumulation / epilogue are always f32.
    """
    K, N = w.shape

    # v6e/v7x MXUs are 256 lanes wide: keep output tiles a multiple of 256 once
    # N is big enough (a 256-multiple is also fine on 128-wide v5e).
    align_n = 256 if _round_up(N, 128) >= 256 else 128
    tn0, N_pad = _pick_tile(N, align_n, max(tn_max, align_n))
    tk, K_pad = _pick_tile(K, 128, max(tk_max, 128))

    # Pack the four per-feature vectors into one (4, N_pad) f32 array.
    params = jnp.stack([alpha1, beta1, alpha2, beta2]).astype(jnp.float32)
    if N_pad != N:
        params = jnp.pad(params, ((0, 0), (0, N_pad - N)))

    # Pad + cast W once (zeros contribute nothing; padded cols sliced off later).
    w_prep = w
    if (K_pad, N_pad) != (K, N):
        w_prep = jnp.pad(w_prep, ((0, K_pad - K), (0, N_pad - N)))
    if mxu_dtype is not None:
        w_prep = w_prep.astype(mxu_dtype)

    # Batch-tile alignment = native sublane pack of the MXU input dtype.
    sublane = 8 if mxu_dtype is None else max(8, 32 // jnp.dtype(mxu_dtype).itemsize)

    def apply(x):
        B, Kx = x.shape
        assert Kx == K, (Kx, K)
        out_dtype = x.dtype

        tm, M_pad = _pick_tile(B, sublane, max(tm_max, sublane))

        # v7x has 2 TensorCores: make sure there are >= 2 "parallel" blocks to
        # shard when possible (prefer splitting N).
        tn = tn0
        while (M_pad // tm) * (N_pad // tn) < 2 and tn % 256 == 0:
            tn //= 2

        x_p = x
        if (M_pad, K_pad) != (B, K):
            x_p = jnp.pad(x_p, ((0, M_pad - B), (0, K_pad - K)))
        if mxu_dtype is not None:
            x_p = x_p.astype(mxu_dtype)

        grid = (M_pad // tm, N_pad // tn, K_pad // tk)

        cost = pl.CostEstimate(
            flops=2 * M_pad * K_pad * N_pad,
            transcendentals=M_pad * N_pad,
            bytes_accessed=(x_p.size * x_p.dtype.itemsize
                            + w_prep.size * w_prep.dtype.itemsize
                            + params.size * 4
                            + M_pad * N_pad * jnp.dtype(out_dtype).itemsize),
        )

        out = pl.pallas_call(
            taaf_dense_kernel,
            out_shape=jax.ShapeDtypeStruct((M_pad, N_pad), out_dtype),
            grid_spec=pltpu.PrefetchScalarGridSpec(
                num_scalar_prefetch=0,
                grid=grid,
                in_specs=[
                    pl.BlockSpec((tm, tk), lambda i, j, k: (i, k)),   # x tile
                    pl.BlockSpec((tk, tn), lambda i, j, k: (k, j)),   # w tile
                    pl.BlockSpec((4, tn), lambda i, j, k: (0, j)),    # packed params
                ],
                out_specs=pl.BlockSpec((tm, tn), lambda i, j, k: (i, j)),
                scratch_shapes=[pltpu.VMEM((tm, tn), jnp.float32)],   # f32 accumulator
            ),
            compiler_params=pltpu.CompilerParams(
                # batch / n_hidden independent -> shard across TCs; K reduction
                # stays "arbitrary" and last.
                dimension_semantics=("parallel", "parallel", "arbitrary"),
                # ~5 MiB working set at max tiles; 32 MiB is safe on every gen
                # (v7x physical VMEM is 64 MiB).
                vmem_limit_bytes=32 * 1024 * 1024,
            ),
            cost_estimate=cost,
        )(x_p, w_prep, params)

        return out[:B, :N]

    return apply


def taaf_dense(x, w, alpha1, beta1, alpha2, beta2, **kwargs):
    """One-shot convenience wrapper (for reuse, call make_taaf_dense once)."""
    return make_taaf_dense(w, alpha1, beta1, alpha2, beta2, **kwargs)(x)


def taaf_dense_ref(x, w, a1, b1, a2, b2, mxu_dtype=None):
    """Pure-JAX reference (mxu_dtype mirrors the kernel's MXU-input cast)."""
    if mxu_dtype is not None:
        x = x.astype(mxu_dtype)
        w = w.astype(mxu_dtype)
    h = jnp.dot(x, w, preferred_element_type=jnp.float32,
                precision=jax.lax.Precision.HIGHEST)
    h = a1 * h + b1
    h = jnp.tanh(h)
    return a2 * h + b2


if __name__ == "__main__":
    root = jax.random.PRNGKey(0)

    def make_inputs(batch, in_size, n_hidden, seed, trained_params):
        kx, kw, ka, kb = jax.random.split(jax.random.fold_in(root, seed), 4)
        x = jax.random.normal(kx, (batch, in_size), dtype=jnp.float32)

        # nn.Linear default init: U(-1/sqrt(in_size), 1/sqrt(in_size)), no bias.
        bound = 1.0 / np.sqrt(in_size)
        w_pt = jax.random.uniform(kw, (n_hidden, in_size),
                                  minval=-bound, maxval=bound,
                                  dtype=jnp.float32)      # PyTorch layout (out, in)
        w = w_pt.T                                         # kernel layout (in, out)

        if trained_params:
            # "trained" ATU params: exercise the broadcast + epilogue math.
            a1, a2 = jax.random.uniform(ka, (2, n_hidden), minval=0.5, maxval=1.5)
            b1, b2 = jax.random.uniform(kb, (2, n_hidden), minval=-0.5, maxval=0.5)
        else:
            # ATU __init__ values: alpha = ones, beta = zeros.
            a1 = jnp.ones((n_hidden,), jnp.float32)
            b1 = jnp.zeros((n_hidden,), jnp.float32)
            a2 = jnp.ones((n_hidden,), jnp.float32)
            b2 = jnp.zeros((n_hidden,), jnp.float32)
        return x, w, (a1, b1, a2, b2)

    # 1) module-demo-scale shapes, default path (bf16 MXU inputs, f32 acc/epilogue)
    x, w, p = make_inputs(batch=8, in_size=32, n_hidden=32, seed=0,
                          trained_params=False)
    fwd = make_taaf_dense(w, *p)                 # weights padded / cast once
    out = jax.block_until_ready(fwd(x))
    np.testing.assert_allclose(np.asarray(out),
                               np.asarray(taaf_dense_ref(x, w, *p, mxu_dtype=jnp.bfloat16)),
                               rtol=1e-4, atol=1e-4)
    np.testing.assert_allclose(np.asarray(out),
                               np.asarray(taaf_dense_ref(x, w, *p)),
                               rtol=5e-2, atol=5e-2)

    # 2) multi-tile path: exercises M/N/K tiling, K accumulator, N padding to a
    #    256-multiple, and the >=2-parallel-blocks tn split (v7x megacore).
    x, w, p = make_inputs(batch=256, in_size=640, n_hidden=384, seed=1,
                          trained_params=True)
    fwd = make_taaf_dense(w, *p)
    out = jax.block_until_ready(fwd(x))
    np.testing.assert_allclose(np.asarray(out),
                               np.asarray(taaf_dense_ref(x, w, *p, mxu_dtype=jnp.bfloat16)),
                               rtol=1e-4, atol=1e-4)
    np.testing.assert_allclose(np.asarray(out),
                               np.asarray(taaf_dense_ref(x, w, *p)),
                               rtol=5e-2, atol=5e-2)

    # 3) exact-precision path (f32 MXU inputs) still supported.
    x, w, p = make_inputs(batch=8, in_size=32, n_hidden=32, seed=2,
                          trained_params=True)
    out = jax.block_until_ready(taaf_dense(x, w, *p, mxu_dtype=None))
    np.testing.assert_allclose(np.asarray(out),
                               np.asarray(taaf_dense_ref(x, w, *p)),
                               rtol=1e-4, atol=1e-4)

    print("KERNEL_OK")
</pallas_src>

<mosaic_0001>
module attributes {stable_mosaic.version = 11 : i64} {
  func.func @taaf_dense_kernel(%arg0: i32, %arg1: i32, %arg2: i32, %arg3: memref<16x128xbf16, #tpu.memory_space<vmem>>, %arg4: memref<128x128xbf16, #tpu.memory_space<vmem>>, %arg5: memref<4x128xf32, #tpu.memory_space<vmem>>, %arg6: memref<16x128xf32, #tpu.memory_space<vmem>>, %arg7: memref<16x128xf32, #tpu.memory_space<vmem>>) attributes {dimension_semantics = [#tpu.dimension_semantics<parallel>, #tpu.dimension_semantics<parallel>, #tpu.dimension_semantics<arbitrary>], iteration_bounds = array<i64: 1, 1, 1>, scalar_prefetch = 0 : i64, scratch_operands = 1 : i64, tpu.core_type = #tpu.core_type<tc>, window_params = [{transform_indices = @transform_0, window_bounds = array<i64: 16, 128>}, {transform_indices = @transform_1, window_bounds = array<i64: 128, 128>}, {transform_indices = @transform_2, window_bounds = array<i64: 4, 128>}, {transform_indices = @transform_3, window_bounds = array<i64: 16, 128>}]} {
    %c0 = arith.constant 0 : index
    %c0_0 = arith.constant 0 : index
    %0 = vector.load %arg3[%c0, %c0_0] : memref<16x128xbf16, #tpu.memory_space<vmem>>, vector<16x128xbf16>
    %c0_1 = arith.constant 0 : index
    %c0_2 = arith.constant 0 : index
    %1 = vector.load %arg4[%c0_1, %c0_2] : memref<128x128xbf16, #tpu.memory_space<vmem>>, vector<128x128xbf16>
    %cst = arith.constant dense<0.000000e+00> : vector<16x128xf32>
    %2 = tpu.matmul %0, %1, %cst {dimension_numbers = #tpu.dot_dimension_numbers<[1], [0], [0], [1], [0, 0, 1, 1], [], []>} : vector<16x128xbf16>, vector<128x128xbf16>, vector<16x128xf32> -> vector<16x128xf32>
    %c0_i32 = arith.constant 0 : i32
    %3 = arith.cmpi eq, %arg2, %c0_i32 : i32
    %4 = arith.extui %3 : i1 to i32
    %c0_i32_3 = arith.constant 0 : i32
    %5 = arith.cmpi ne, %4, %c0_i32_3 : i32
    scf.if %5 {
      %c0_8 = arith.constant 0 : index
      %c0_9 = arith.constant 0 : index
      %12 = vector.load %arg7[%c0_8, %c0_9] : memref<16x128xf32, #tpu.memory_space<vmem>>, vector<16x128xf32>
      tpu.vector_store %arg7[%c0_8, %c0_9], %2 {strides = array<i32>} : memref<16x128xf32, #tpu.memory_space<vmem>>, vector<16x128xf32>,
    } else {
    }
    %c0_i32_4 = arith.constant 0 : i32
    %6 = arith.cmpi sgt, %arg2, %c0_i32_4 : i32
    %7 = arith.extui %6 : i1 to i32
    %c0_i32_5 = arith.constant 0 : i32
    %8 = arith.cmpi ne, %7, %c0_i32_5 : i32
    scf.if %8 {
      %c0_8 = arith.constant 0 : index
      %c0_9 = arith.constant 0 : index
      %12 = vector.load %arg7[%c0_8, %c0_9] : memref<16x128xf32, #tpu.memory_space<vmem>>, vector<16x128xf32>
      %13 = arith.addf %12, %2 : vector<16x128xf32>
      %c0_10 = arith.constant 0 : index
      %c0_11 = arith.constant 0 : index
      %14 = vector.load %arg7[%c0_10, %c0_11] : memref<16x128xf32, #tpu.memory_space<vmem>>, vector<16x128xf32>
      tpu.vector_store %arg7[%c0_10, %c0_11], %13 {strides = array<i32>} : memref<16x128xf32, #tpu.memory_space<vmem>>, vector<16x128xf32>,
    } else {
    }
    %c0_i32_6 = arith.constant 0 : i32
    %9 = arith.cmpi eq, %arg2, %c0_i32_6 : i32
    %10 = arith.extui %9 : i1 to i32
    %c0_i32_7 = arith.constant 0 : i32
    %11 = arith.cmpi ne, %10, %c0_i32_7 : i32
    scf.if %11 {
      %c0_8 = arith.constant 0 : index
      %c0_9 = arith.constant 0 : index
      %12 = vector.load %arg5[%c0_8, %c0_9] : memref<4x128xf32, #tpu.memory_space<vmem>>, vector<4x128xf32>
      %13 = vector.extract_strided_slice %12 {offsets = [0, 0], sizes = [1, 128], strides = [1, 1]} : vector<4x128xf32> to vector<1x128xf32>
      %14 = vector.extract_strided_slice %12 {offsets = [1, 0], sizes = [1, 128], strides = [1, 1]} : vector<4x128xf32> to vector<1x128xf32>
      %15 = vector.extract_strided_slice %12 {offsets = [2, 0], sizes = [1, 128], strides = [1, 1]} : vector<4x128xf32> to vector<1x128xf32>
      %16 = vector.extract_strided_slice %12 {offsets = [3, 0], sizes = [1, 128], strides = [1, 1]} : vector<4x128xf32> to vector<1x128xf32>
      %c0_10 = arith.constant 0 : index
      %c0_11 = arith.constant 0 : index
      %17 = vector.load %arg7[%c0_10, %c0_11] : memref<16x128xf32, #tpu.memory_space<vmem>>, vector<16x128xf32>
      %18 = vector.broadcast %13 : vector<1x128xf32> to vector<16x128xf32>
      %19 = arith.mulf %18, %17 : vector<16x128xf32>
      %20 = vector.broadcast %14 : vector<1x128xf32> to vector<16x128xf32>
      %21 = arith.addf %19, %20 : vector<16x128xf32>
      %22 = math.tanh %21 : vector<16x128xf32>
      %23 = vector.broadcast %15 : vector<1x128xf32> to vector<16x128xf32>
      %24 = arith.mulf %23, %22 : vector<16x128xf32>
      %25 = vector.broadcast %16 : vector<1x128xf32> to vector<16x128xf32>
      %26 = arith.addf %24, %25 : vector<16x128xf32>
      %c0_12 = arith.constant 0 : index
      %c0_13 = arith.constant 0 : index
      %27 = vector.load %arg6[%c0_12, %c0_13] : memref<16x128xf32, #tpu.memory_space<vmem>>, vector<16x128xf32>
      tpu.vector_store %arg6[%c0_12, %c0_13], %26 {strides = array<i32>} : memref<16x128xf32, #tpu.memory_space<vmem>>, vector<16x128xf32>,
    } else {
    }
    return
  }
  func.func @transform_0(%arg0: i32, %arg1: i32, %arg2: i32) -> (i32, i32) {
    %c0_i32 = arith.constant 0 : i32
    return %arg0, %arg2 : i32, i32
  }
  func.func @transform_1(%arg0: i32, %arg1: i32, %arg2: i32) -> (i32, i32) {
    %c0_i32 = arith.constant 0 : i32
    return %arg2, %arg1 : i32, i32
  }
  func.func @transform_2(%arg0: i32, %arg1: i32, %arg2: i32) -> (i32, i32) {
    %c0_i32 = arith.constant 0 : i32
    %c0_i32_0 = arith.constant 0 : i32
    return %c0_i32, %arg1 : i32, i32
  }
  func.func @transform_3(%arg0: i32, %arg1: i32, %arg2: i32) -> (i32, i32) {
    %c0_i32 = arith.constant 0 : i32
    return %arg0, %arg1 : i32, i32
  }
}

</mosaic_0001>

<llo_original>
// kernel: tpu_custom_call.1
$region0: #{tpu_custom_call.1}
  #allocation0 [shape = 'u32[]', space=smem, size = 0x4, offset = 0x4, fixed_abs, tag = 'smem constant byte address 0x4 - core index']
  #allocation1 [shape = 'u32[144,128]{1,0:T(1,128)}', space=vmem, size = 0x12000, scoped, tag = 'internal scratch']
  #allocation2 [shape = 'f32[16,128]{1,0:T(8,128)}', space=vmem, size = 0x2000, scoped, tag = 'scratch operand']
  %s0 = inlined_call_operand.hbm [shape: bf16[16,128], index: 0, kind: input, shape index: {}]
  %s1 = inlined_call_operand.hbm [shape: bf16[128,128], index: 1, kind: input, shape index: {}]
  %s2 = inlined_call_operand.hbm [shape: f32[4,128], index: 2, kind: input, shape index: {}]
  %s3 = inlined_call_operand.hbm [shape: f32[16,128], index: 3, kind: output, shape index: {}]
  %s4 = sld [smem:[#allocation0]]
  $region46: #{tpu_custom_call.1} parent=0
    _
  %s6 = ssub.s32 1, %s4
  %s7 = scalar_select 0, %s6, %s4
  $region1: #{tpu_custom_call.1} parent=0
    #allocation3 [shape = 'u8[4096]{0}', space=vmem, size = 0x1000, scoped, tag = 'input window, operand 0, single buffered']
    #allocation4 [shape = 's32[1]{0}', space=sflag, size = 0x4, scoped, tag = 'scoped memory for tpu_custom_call.1']
    #allocation5 [shape = 's32[1]{0}', space=sflag, size = 0x4, scoped, tag = 'scoped memory for tpu_custom_call.1']
    #allocation6 [shape = 'u8[32768]{0}', space=vmem, size = 0x8000, scoped, tag = 'input window, operand 1, single buffered']
    #allocation7 [shape = 's32[1]{0}', space=sflag, size = 0x4, scoped, tag = 'scoped memory for tpu_custom_call.1']
    #allocation8 [shape = 'u8[2048]{0}', space=vmem, size = 0x800, scoped, tag = 'input window, operand 2, single buffered']
    #allocation9 [shape = 'u8[8192]{0}', space=vmem, size = 0x2000, scoped, tag = 'output window, operand 0, single buffered']
    %8 = vsyncpa [#allocation4], 0
    %9 = vsyncpa [#allocation7], 0
    %10 = vsyncpa [#allocation5], 0
    // Predicated region
    $region2: #{tpu_custom_call.1} parent=1 // pred_check
      _
    $region3: #{tpu_custom_call.1} parent=1 // pred_check_branch
      %12 = sbr.rel (0) target = $region5
    $region4: #{tpu_custom_call.1} parent=1 // pred_region
      %s14 = ssub.s32 128, 128
      %15 = vsyncadd [#allocation4], %s14
      %s16 = sshll.u32 [#allocation3], 4
      %s17 = int_to_ptr.vmem [resolvable:$true] %s16
      %22 = dma.hbm_to_vmem [thread:$0]  %s0, 128, %s17, [#allocation4], 64, 64, 4
    $region5: #{tpu_custom_call.1} parent=1 // pred_fallthru
      _
    // Predicated region
    $region6: #{tpu_custom_call.1} parent=1 // pred_check
      _
    $region7: #{tpu_custom_call.1} parent=1 // pred_check_branch
      %24 = sbr.rel (0) target = $region9
    $region8: #{tpu_custom_call.1} parent=1 // pred_region
      %s26 = ssub.s32 1024, 1024
      %27 = vsyncadd [#allocation7], %s26
      %s28 = sshll.u32 [#allocation6], 4
      %s29 = int_to_ptr.vmem [resolvable:$true] %s28
      %34 = dma.hbm_to_vmem [thread:$0]  %s1, 1024, %s29, [#allocation7], 64, 64, 4
    $region9: #{tpu_custom_call.1} parent=1 // pred_fallthru
      _
    // Predicated region
    $region10: #{tpu_custom_call.1} parent=1 // pred_check
      _
    $region11: #{tpu_custom_call.1} parent=1 // pred_check_branch
      %36 = sbr.rel (0) target = $region13
    $region12: #{tpu_custom_call.1} parent=1 // pred_region
      %s38 = ssub.s32 64, 64
      %39 = vsyncadd [#allocation7], %s38
      %s41 = sshll.u32 [#allocation8], 4
      %s42 = int_to_ptr.vmem [resolvable:$true] %s41
      %44 = dma.hbm_to_vmem [thread:$0]  %s2, 64, %s42, [#allocation7]
    $region13: #{tpu_custom_call.1} parent=1 // pred_fallthru
      _
    // Predicated region
    $region14: #{tpu_custom_call.1} parent=1 // pred_check
      _
    $region15: #{tpu_custom_call.1} parent=1 // pred_check_branch
      %46 = sbr.rel (0) target = $region17
    $region16: #{tpu_custom_call.1} parent=1 // pred_region
      %47 = dma.done [#allocation4], 128
    $region17: #{tpu_custom_call.1} parent=1 // pred_fallthru
      _
    // Predicated region
    $region18: #{tpu_custom_call.1} parent=1 // pred_check
      _
    $region19: #{tpu_custom_call.1} parent=1 // pred_check_branch
      %49 = sbr.rel (0) target = $region21
    $region20: #{tpu_custom_call.1} parent=1 // pred_region
      %50 = dma.done [#allocation7], 1024
    $region21: #{tpu_custom_call.1} parent=1 // pred_fallthru
      _
    // Predicated region
    $region22: #{tpu_custom_call.1} parent=1 // pred_check
      _
    $region23: #{tpu_custom_call.1} parent=1 // pred_check_branch
      %52 = sbr.rel (0) target = $region25
    $region24: #{tpu_custom_call.1} parent=1 // pred_region
      %53 = dma.done [#allocation7], 64
    $region25: #{tpu_custom_call.1} parent=1 // pred_fallthru
      _
    %v55 = vld [vmem:[#allocation3] sm:$0xf]
    %v56 = vld [vmem:[#allocation3 + $0x4] sm:$0xf]
    %v57 = vld [vmem:[#allocation6] sm:$0xf]
    %v58 = vld [vmem:[#allocation6 + $0x4] sm:$0xf]
    %v59 = vld [vmem:[#allocation6 + $0x8] sm:$0xf]
    %v60 = vld [vmem:[#allocation6 + $0xc] sm:$0xf]
    %v61 = vld [vmem:[#allocation6 + $0x10] sm:$0xf]
    %v62 = vld [vmem:[#allocation6 + $0x14] sm:$0xf]
    %v63 = vld [vmem:[#allocation6 + $0x18] sm:$0xf]
    %v64 = vld [vmem:[#allocation6 + $0x1c] sm:$0xf]
    %v65 = vld [vmem:[#allocation6 + $0x20] sm:$0xf]
    %v66 = vld [vmem:[#allocation6 + $0x24] sm:$0xf]
    %v67 = vld [vmem:[#allocation6 + $0x28] sm:$0xf]
    %v68 = vld [vmem:[#allocation6 + $0x2c] sm:$0xf]
    %v69 = vld [vmem:[#allocation6 + $0x30] sm:$0xf]
    %v70 = vld [vmem:[#allocation6 + $0x34] sm:$0xf]
    %v71 = vld [vmem:[#allocation6 + $0x38] sm:$0xf]
    %v72 = vld [vmem:[#allocation6 + $0x3c] sm:$0xf]
    %v75 = vunpack.c.l.b16 %v55
    %v76 = vunpack.c.l.b16 %v56
    %v77 = vpack.c.b16 %v76, %v75
    %v95 = vunpack.c.l.b16 %v57
    %v96 = vunpack.c.l.b16 %v58
    %v97 = vunpack.c.l.b16 %v59
    %v98 = vunpack.c.l.b16 %v60
    %v99 = vunpack.c.l.b16 %v61
    %v100 = vunpack.c.l.b16 %v62
    %v101 = vunpack.c.l.b16 %v63
    %v102 = vunpack.c.l.b16 %v64
    %v103 = vunpack.c.l.b16 %v65
    %v104 = vunpack.c.l.b16 %v66
    %v105 = vunpack.c.l.b16 %v67
    %v106 = vunpack.c.l.b16 %v68
    %v107 = vunpack.c.l.b16 %v69
    %v108 = vunpack.c.l.b16 %v70
    %v109 = vunpack.c.l.b16 %v71
    %v110 = vunpack.c.l.b16 %v72
    %v111 = vpack.c.b16 %v96, %v95
    %v112 = vpack.c.b16 %v98, %v97
    %v113 = vpack.c.b16 %v100, %v99
    %v114 = vpack.c.b16 %v102, %v101
    %v115 = vpack.c.b16 %v104, %v103
    %v116 = vpack.c.b16 %v106, %v105
    %v117 = vpack.c.b16 %v108, %v107
    %v118 = vpack.c.b16 %v110, %v109
    %127 = vmatprep.subr.bf16.mxu0 0
    %128 = vmatpush1.bf16.msra.mxu0 %v118
    %129 = vmatprep.subr.bf16.mxu0 0
    %130 = vmatpush1.bf16.msra.mxu0 %v117
    %131 = vmatprep.subr.bf16.mxu0 0
    %132 = vmatpush1.bf16.msra.mxu0 %v116
    %133 = vmatprep.subr.bf16.mxu0 0
    %134 = vmatpush1.bf16.msra.mxu0 %v115
    %135 = vmatprep.subr.bf16.mxu0 0
    %136 = vmatpush1.bf16.msra.mxu0 %v114
    %137 = vmatprep.subr.bf16.mxu0 0
    %138 = vmatpush1.bf16.msra.mxu0 %v113
    %139 = vmatprep.subr.bf16.mxu0 0
    %140 = vmatpush1.bf16.msra.mxu0 %v112
    %141 = vmatprep.subr.bf16.mxu0 0
    %142 = vmatpush1.bf16.msra.mxu0 %v111
    %143 = vmatprep.subr.bf16.mxu0 0
    %144 = vmatpush2.bf16.msra.mxu0 0
    %145 = vmatprep.subr.bf16.mxu0 0
    %146 = vmatpush2.bf16.msra.mxu0 0
    %147 = vmatprep.subr.bf16.mxu0 0
    %148 = vmatpush2.bf16.msra.mxu0 0
    %149 = vmatprep.subr.bf16.mxu0 0
    %150 = vmatpush2.bf16.msra.mxu0 0
    %151 = vmatprep.subr.bf16.mxu0 0
    %152 = vmatpush2.bf16.msra.mxu0 0
    %153 = vmatprep.subr.bf16.mxu0 0
    %154 = vmatpush2.bf16.msra.mxu0 0
    %155 = vmatprep.subr.bf16.mxu0 0
    %156 = vmatpush2.bf16.msra.mxu0 0
    %157 = vmatprep.subr.bf16.mxu0 0
    %158 = vmatpush2.bf16.msra.mxu0 0
    %159 = vmatprep.mubr.bf16.mxu0 0
    %160 = vmatmul.mubr.bf16.gmra.mxu0 %v77
    %v161 = vpop.f32.mrf.mxu0
    %v162 = vadd.f32 0.0, %v161
    %v163 = vpop.f32.mrf.mxu0
    %v164 = vpop.f32.mrf.mxu0
    %v165 = vadd.f32 0.0, %v164
    %v166 = vpop.f32.mrf.mxu0
    %167 = vdwg.mxu0
    %p168 = scmp.eq.s32.totalorder 0, 0
    // Predicated region
    $region26: #{tpu_custom_call.1} parent=1 // pred_check
      %p169 = pneg %p168
    $region27: #{tpu_custom_call.1} parent=1 // pred_check_branch
      %171 = sbr.rel (%p169) target = $region29
    $region28: #{tpu_custom_call.1} parent=1 // pred_region
      %172 = vst [vmem:[#allocation2] sm:$0xff] %v162
      %173 = vst [vmem:[#allocation2 + $0x8] sm:$0xff] %v165
    $region29: #{tpu_custom_call.1} parent=1 // pred_fallthru
      _
    %p174 = scmp.gt.s32.totalorder 0, 0
    // Predicated region
    $region30: #{tpu_custom_call.1} parent=1 // pred_check
      %p175 = pneg %p174
    $region31: #{tpu_custom_call.1} parent=1 // pred_check_branch
      %177 = sbr.rel (%p175) target = $region33
    $region32: #{tpu_custom_call.1} parent=1 // pred_region
      %v178 = vld [vmem:[#allocation2] sm:$0xff]
      %v179 = vld [vmem:[#allocation2 + $0x8] sm:$0xff]
      %v180 = vadd.f32 %v178, %v162
      %v181 = vadd.f32 %v179, %v165
      %182 = vst [vmem:[#allocation2] sm:$0xff] %v180
      %183 = vst [vmem:[#allocation2 + $0x8] sm:$0xff] %v181
    $region33: #{tpu_custom_call.1} parent=1 // pred_fallthru
      _
    // Predicated region
    $region34: #{tpu_custom_call.1} parent=1 // pred_check
      %p184 = pneg %p168
    $region35: #{tpu_custom_call.1} parent=1 // pred_check_branch
      %186 = sbr.rel (%p184) target = $region37
    $region36: #{tpu_custom_call.1} parent=1 // pred_region
      %v187 = vld [vmem:[#allocation8] sm:$0xf]
      %v188 = vld [vmem:[#allocation2] sm:$0xff]
      %v189 = vld [vmem:[#allocation2 + $0x8] sm:$0xff]
      %v190 = vlaneseq
      %v191 = vshrl.u32 %v190, 7
      %v192 = vsub.s32 0, %v191
      %v193 = vrot.slane %v187, %v192
      %v194 = vmul.f32 %v193, %v188
      %v195 = vmul.f32 %v193, %v189
      %v196 = vlaneseq
      %v197 = vshrl.u32 %v196, 7
      %v198 = vsub.s32 1, %v197
      %v199 = vrot.slane %v187, %v198
      %v200 = vadd.f32 %v194, %v199
      %v201 = vadd.f32 %v195, %v199
      %v202 = vtanh.pop %v200
      %v203 = vtanh.pop %v201
      %v204 = vlaneseq
      %v205 = vshrl.u32 %v204, 7
      %v206 = vsub.s32 2, %v205
      %v207 = vrot.slane %v187, %v206
      %v208 = vmul.f32 %v207, %v202
      %v209 = vmul.f32 %v207, %v203
      %v210 = vlaneseq
      %v211 = vshrl.u32 %v210, 7
      %v212 = vsub.s32 3, %v211
      %v213 = vrot.slane %v187, %v212
      %v214 = vadd.f32 %v208, %v213
      %v215 = vadd.f32 %v209, %v213
      %216 = vst [vmem:[#allocation9] sm:$0xff] %v214
      %217 = vst [vmem:[#allocation9 + $0x8] sm:$0xff] %v215
    $region37: #{tpu_custom_call.1} parent=1 // pred_fallthru
      _
    // Predicated region
    $region38: #{tpu_custom_call.1} parent=1 // pred_check
      _
    $region39: #{tpu_custom_call.1} parent=1 // pred_check_branch
      %219 = sbr.rel (0) target = $region41
    $region40: #{tpu_custom_call.1} parent=1 // pred_region
      %s221 = ssub.s32 256, 256
      %222 = vsyncadd [#allocation5], %s221
      %s223 = sshll.u32 [#allocation9], 4
      %s224 = int_to_ptr.vmem [resolvable:$true] %s223
      %229 = dma.vmem_to_hbm [thread:$0]  %s224, 256, %s3, [#allocation5], 128, 128, 8
    $region41: #{tpu_custom_call.1} parent=1 // pred_fallthru
      _
    // Predicated region
    $region42: #{tpu_custom_call.1} parent=1 // pred_check
      _
    $region43: #{tpu_custom_call.1} parent=1 // pred_check_branch
      %231 = sbr.rel (0) target = $region45
    $region44: #{tpu_custom_call.1} parent=1 // pred_region
      %232 = dma.done [#allocation5], 256
    $region45: #{tpu_custom_call.1} parent=1 // pred_fallthru
      _
    %233 = vsyncpa [#allocation4], 1
    %234 = vsyncpa [#allocation7], 1
    %235 = vsyncpa [#allocation5], 1

</llo_original>
